<compile_context>
chip_gen: v6e
topology: v6e:2x2x1
jax: 0.10.0
libtpu: 0.0.40
codegen_flags: <defaults>
</compile_context>

<pallas_src>
import jax
import jax.numpy as jnp
from jax.experimental import pallas as pl
from jax.experimental.pallas import tpu as pltpu


def _round_up(x, m):
    return ((x + m - 1) // m) * m


def _cdiv(a, b):
    return (a + b - 1) // b


def ffn_kernel_full(x_ref, w1_ref, b1_ref, w2_ref, b2_ref, o_ref):
    """Full hidden dim resident: y = relu(x @ W1 + b1) @ W2 + b2, no reduction carry."""
    h = jnp.dot(x_ref[...], w1_ref[...], preferred_element_type=jnp.float32)
    h = jnp.maximum(h + b1_ref[...], 0.0)
    # TODO(synk): dropout is identity (eval mode); training-mode dropout would need
    # pltpu.prng_seed / pltpu.prng_random_bits with inverse-scale masking.
    y = jnp.dot(h.astype(w2_ref.dtype), w2_ref[...], preferred_element_type=jnp.float32)
    o_ref[...] = (y + b2_ref[...]).astype(o_ref.dtype)


def ffn_kernel_tiled(x_ref, w1_ref, b1_ref, w2_ref, b2_ref, o_ref, acc_ref):
    """Hidden-tiled variant: accumulate partial second matmul over the h grid axis."""
    h_idx = pl.program_id(1)

    @pl.when(h_idx == 0)
    def _init():
        acc_ref[...] = jnp.zeros_like(acc_ref)

    h = jnp.dot(x_ref[...], w1_ref[...], preferred_element_type=jnp.float32)
    h = jnp.maximum(h + b1_ref[...], 0.0)
    acc_ref[...] += jnp.dot(h.astype(w2_ref.dtype), w2_ref[...],
                            preferred_element_type=jnp.float32)

    @pl.when(h_idx == pl.num_programs(1) - 1)
    def _finalize():
        o_ref[...] = (acc_ref[...] + b2_ref[...]).astype(o_ref.dtype)


def positionwise_feed_forward(x, w1, b1, w2, b2, *, tm=None, th=None):
    """Positionwise FFN.

    x:  (B, T, D) activations.
    w1: (D, H), b1: (H,)   first Linear  (weights stored (in, out), i.e. PyTorch weight.T)
    w2: (H, D), b2: (D,)   second Linear
    Returns (B, T, D) in x.dtype.
    """
    B, T, D = x.shape
    H = w1.shape[1]
    assert w1.shape == (D, H) and w2.shape == (H, D)
    assert b1.shape == (H,) and b2.shape == (D,)
    M = B * T

    xb = jnp.dtype(x.dtype).itemsize
    wb = jnp.dtype(w1.dtype).itemsize
    bb = jnp.dtype(b1.dtype).itemsize

    # ---- hardware VMEM budget ---------------------------------------------
    try:
        vmem_cap = int(pltpu.get_tpu_info().vmem_capacity_bytes)
    except Exception:
        vmem_cap = 64 << 20                       # conservative (v7x per-TensorCore)
    budget = min(int(vmem_cap * 0.80), vmem_cap - (8 << 20))

    # ---- row tile -----------------------------------------------------------
    # Sublane granularity depends on dtype packing: 8 (f32), 16 (bf16), 32 (int8/fp8).
    sub = max(8, 32 // xb)
    if tm is None:
        tm = 512 if vmem_cap >= (100 << 20) else 256   # bigger tiles on 128 MiB parts
    tm_eff = _round_up(min(tm, _round_up(M, sub)), sub)

    hp128 = _round_up(H, 128)

    def _full_vmem(tm_, h_):
        # x/out double-buffered, weights/biases single-buffered (constant block index),
        # plus f32 intermediate, its cast copy, and the f32 output temp.
        return (4 * tm_ * D * xb
                + 2 * D * h_ * wb + h_ * bb + D * bb
                + tm_ * h_ * (4 + wb) + tm_ * D * 4)

    def _tiled_vmem(tm_, th_):
        return (4 * tm_ * D * xb
                + 4 * D * th_ * wb + 2 * th_ * bb + D * bb
                + tm_ * D * 4                       # f32 accumulator scratch
                + tm_ * th_ * (4 + wb))             # f32 intermediate + cast copy

    # ---- hidden tile: keep full H resident whenever the budget allows -------
    if th is None:
        if _full_vmem(tm_eff, hp128) <= budget:
            th = hp128
        else:
            while True:
                th = next((c for c in (2048, 1024, 512, 256, 128)
                           if c <= hp128 and hp128 % c == 0
                           and _tiled_vmem(tm_eff, c) <= budget), None)
                if th is not None or tm_eff <= sub:
                    break
                tm_eff = _round_up(max(sub, tm_eff // 2), sub)
            if th is None:
                th = 128
    else:
        th = min(_round_up(th, 128), hp128)
        while hp128 % th:
            th -= 128
    Hp = hp128
    grid_h = Hp // th

    # ---- keep the row-tile count even (>= 2) for v7x's two TensorCores ------
    n_tiles = _cdiv(M, tm_eff)
    if n_tiles > 1 and n_tiles % 2 == 1:
        tm_eff = _round_up(_cdiv(M, n_tiles + 1), sub)
        n_tiles = _cdiv(M, tm_eff)
    Mp = n_tiles * tm_eff

    # ---- wrapper-side padding / reshape --------------------------------------
    x2d = x.reshape(M, D)
    if Mp != M:
        x2d = jnp.pad(x2d, ((0, Mp - M), (0, 0)))
    w1p, b1p, w2p = w1, b1, w2
    if Hp != H:
        # Zero-padded hidden units are exact: relu(0 + 0) = 0 contributes nothing to y.
        w1p = jnp.pad(w1, ((0, 0), (0, Hp - H)))
        b1p = jnp.pad(b1, ((0, Hp - H),))
        w2p = jnp.pad(w2, ((0, Hp - H), (0, 0)))
    b1_2d = b1p.reshape(1, Hp)
    b2_2d = b2.reshape(1, D)

    # ---- VMEM limit / scheduler cost hint -------------------------------------
    vmem_bytes = _full_vmem(tm_eff, Hp) if grid_h == 1 else _tiled_vmem(tm_eff, th)
    vmem_limit = min(max(32 << 20, int(1.2 * vmem_bytes) + (2 << 20)),
                     int(vmem_cap * 0.9))
    weight_bytes = (w1p.size + w2p.size) * wb + (b1p.size + b2.size) * bb
    weight_streams = n_tiles if grid_h > 1 else 1   # weights re-streamed per row tile when H is tiled
    cost = pl.CostEstimate(
        flops=4 * M * D * Hp,
        transcendentals=0,
        bytes_accessed=int(2 * Mp * D * xb + weight_streams * weight_bytes),
    )

    def _const(shape, index_map, single):
        # Single-buffer blocks whose index never changes across the grid (saves VMEM).
        if single:
            return pl.BlockSpec(shape, index_map, pipeline_mode=pl.Buffered(1))
        return pl.BlockSpec(shape, index_map)

    def _run(single_buffer_const_blocks):
        if grid_h == 1:
            grid_spec = pltpu.PrefetchScalarGridSpec(
                num_scalar_prefetch=0,
                grid=(n_tiles,),
                in_specs=[
                    pl.BlockSpec((tm_eff, D), lambda i: (i, 0)),                       # x rows
                    _const((D, Hp), lambda i: (0, 0), single_buffer_const_blocks),     # W1
                    _const((1, Hp), lambda i: (0, 0), single_buffer_const_blocks),     # b1
                    _const((Hp, D), lambda i: (0, 0), single_buffer_const_blocks),     # W2
                    _const((1, D),  lambda i: (0, 0), single_buffer_const_blocks),     # b2
                ],
                out_specs=pl.BlockSpec((tm_eff, D), lambda i: (i, 0)),
                scratch_shapes=[],
            )
            kernel = ffn_kernel_full
            dims = ("parallel",)
        else:
            grid_spec = pltpu.PrefetchScalarGridSpec(
                num_scalar_prefetch=0,
                grid=(n_tiles, grid_h),
                in_specs=[
                    pl.BlockSpec((tm_eff, D), lambda i, h: (i, 0)),                    # x rows
                    pl.BlockSpec((D, th),     lambda i, h: (0, h)),                    # W1 cols
                    pl.BlockSpec((1, th),     lambda i, h: (0, h)),                    # b1 block
                    pl.BlockSpec((th, D),     lambda i, h: (h, 0)),                    # W2 rows
                    _const((1, D), lambda i, h: (0, 0), single_buffer_const_blocks),   # b2
                ],
                out_specs=pl.BlockSpec((tm_eff, D), lambda i, h: (i, 0)),
                scratch_shapes=[pltpu.VMEM((tm_eff, D), jnp.float32)],
            )
            kernel = ffn_kernel_tiled
            dims = ("parallel", "arbitrary")
        return pl.pallas_call(
            kernel,
            out_shape=jax.ShapeDtypeStruct((Mp, D), x.dtype),
            grid_spec=grid_spec,
            compiler_params=pltpu.CompilerParams(
                dimension_semantics=dims,
                vmem_limit_bytes=vmem_limit,
            ),
            cost_estimate=cost,
        )(x2d, w1p, b1_2d, w2p, b2_2d)

    try:
        out = _run(True)
    except Exception:
        # Fallback for jax versions that reject pl.Buffered(1) on pipelined inputs.
        out = _run(False)

    if Mp != M:
        out = out[:M]
    return out.reshape(B, T, D)


if __name__ == "__main__":
    # Small, FFN-consistent shapes: batch=2, seq=8, input_dim=128, hidden_units=256.
    B, T, D, H = 2, 8, 128, 256

    key = jax.random.PRNGKey(0)
    kx, k1, k2, k3, k4 = jax.random.split(key, 5)

    x = jax.random.normal(kx, (B, T, D), dtype=jnp.float32)
    w1 = jax.random.normal(k1, (D, H), dtype=jnp.float32) * (1.0 / jnp.sqrt(D))
    b1 = jax.random.normal(k2, (H,), dtype=jnp.float32) * 0.01
    w2 = jax.random.normal(k3, (H, D), dtype=jnp.float32) * (1.0 / jnp.sqrt(H))
    b2 = jax.random.normal(k4, (D,), dtype=jnp.float32) * 0.01

    y_ref = jnp.maximum(x @ w1 + b1, 0.0) @ w2 + b2

    # f32 run (exercises the fast full-H-resident path).
    y = positionwise_feed_forward(x, w1, b1, w2, b2)
    jax.block_until_ready(y)
    assert y.shape == (B, T, D)
    assert jnp.allclose(y, y_ref, atol=2e-3, rtol=2e-3)

    # Force the hidden-tiled accumulator path (th=128 -> 2 h-steps) to verify correctness.
    y_tiled = positionwise_feed_forward(x, w1, b1, w2, b2, th=128)
    jax.block_until_ready(y_tiled)
    assert jnp.allclose(y_tiled, y_ref, atol=2e-3, rtol=2e-3)

    # bf16 activations/weights (f32 accumulation inside the kernel) — recommended config
    # for v5e/v6e/v7x MXU rates; loose tolerance vs. the f32 reference.
    y_bf16 = positionwise_feed_forward(
        x.astype(jnp.bfloat16), w1.astype(jnp.bfloat16), b1,
        w2.astype(jnp.bfloat16), b2)
    jax.block_until_ready(y_bf16)
    assert y_bf16.shape == (B, T, D)
    assert jnp.allclose(y_bf16.astype(jnp.float32), y_ref, atol=1e-1, rtol=1e-1)

    print("KERNEL_OK")
</pallas_src>

<mosaic_0001>
module attributes {stable_mosaic.version = 11 : i64} {
  func.func @ffn_kernel_full(%arg0: i32, %arg1: memref<16x128xf32, #tpu.memory_space<vmem>>, %arg2: memref<128x256xf32, #tpu.memory_space<vmem>>, %arg3: memref<1x256xf32, #tpu.memory_space<vmem>>, %arg4: memref<256x128xf32, #tpu.memory_space<vmem>>, %arg5: memref<1x128xf32, #tpu.memory_space<vmem>>, %arg6: memref<16x128xf32, #tpu.memory_space<vmem>>) attributes {dimension_semantics = [#tpu.dimension_semantics<parallel>], iteration_bounds = array<i64: 1>, scalar_prefetch = 0 : i64, scratch_operands = 0 : i64, tpu.core_type = #tpu.core_type<tc>, window_params = [{transform_indices = @transform_0, window_bounds = array<i64: 16, 128>}, {pipeline_mode = #tpu.pipeline_mode<synchronous>, transform_indices = @transform_1, window_bounds = array<i64: 128, 256>}, {pipeline_mode = #tpu.pipeline_mode<synchronous>, transform_indices = @transform_2, window_bounds = array<i64: 1, 256>}, {pipeline_mode = #tpu.pipeline_mode<synchronous>, transform_indices = @transform_3, window_bounds = array<i64: 256, 128>}, {pipeline_mode = #tpu.pipeline_mode<synchronous>, transform_indices = @transform_4, window_bounds = array<i64: 1, 128>}, {transform_indices = @transform_5, window_bounds = array<i64: 16, 128>}]} {
    %c0 = arith.constant 0 : index
    %c0_0 = arith.constant 0 : index
    %0 = vector.load %arg1[%c0, %c0_0] : memref<16x128xf32, #tpu.memory_space<vmem>>, vector<16x128xf32>
    %c0_1 = arith.constant 0 : index
    %c0_2 = arith.constant 0 : index
    %1 = vector.load %arg2[%c0_1, %c0_2] : memref<128x256xf32, #tpu.memory_space<vmem>>, vector<128x256xf32>
    %cst = arith.constant dense<0.000000e+00> : vector<16x256xf32>
    %2 = tpu.matmul %0, %1, %cst {dimension_numbers = #tpu.dot_dimension_numbers<[1], [0], [0], [1], [0, 0, 1, 1], [], []>} : vector<16x128xf32>, vector<128x256xf32>, vector<16x256xf32> -> vector<16x256xf32>
    %c0_3 = arith.constant 0 : index
    %c0_4 = arith.constant 0 : index
    %3 = vector.load %arg3[%c0_3, %c0_4] : memref<1x256xf32, #tpu.memory_space<vmem>>, vector<1x256xf32>
    %4 = vector.broadcast %3 : vector<1x256xf32> to vector<16x256xf32>
    %5 = arith.addf %2, %4 : vector<16x256xf32>
    %cst_5 = arith.constant 0.000000e+00 : f32
    %6 = vector.broadcast %cst_5 : f32 to vector<16x256xf32>
    %7 = arith.maximumf %5, %6 : vector<16x256xf32>
    %c0_6 = arith.constant 0 : index
    %c0_7 = arith.constant 0 : index
    %8 = vector.load %arg4[%c0_6, %c0_7] : memref<256x128xf32, #tpu.memory_space<vmem>>, vector<256x128xf32>
    %cst_8 = arith.constant dense<0.000000e+00> : vector<16x128xf32>
    %9 = tpu.matmul %7, %8, %cst_8 {dimension_numbers = #tpu.dot_dimension_numbers<[1], [0], [0], [1], [0, 0, 1, 1], [], []>} : vector<16x256xf32>, vector<256x128xf32>, vector<16x128xf32> -> vector<16x128xf32>
    %c0_9 = arith.constant 0 : index
    %c0_10 = arith.constant 0 : index
    %10 = vector.load %arg5[%c0_9, %c0_10] : memref<1x128xf32, #tpu.memory_space<vmem>>, vector<1x128xf32>
    %11 = vector.broadcast %10 : vector<1x128xf32> to vector<16x128xf32>
    %12 = arith.addf %9, %11 : vector<16x128xf32>
    %c0_11 = arith.constant 0 : index
    %c0_12 = arith.constant 0 : index
    %13 = vector.load %arg6[%c0_11, %c0_12] : memref<16x128xf32, #tpu.memory_space<vmem>>, vector<16x128xf32>
    tpu.vector_store %arg6[%c0_11, %c0_12], %12 {strides = array<i32>} : memref<16x128xf32, #tpu.memory_space<vmem>>, vector<16x128xf32>,
    return
  }
  func.func @transform_0(%arg0: i32) -> (i32, i32) {
    %c0_i32 = arith.constant 0 : i32
    %c0_i32_0 = arith.constant 0 : i32
    return %arg0, %c0_i32 : i32, i32
  }
  func.func @transform_1(%arg0: i32) -> (i32, i32) {
    %c0_i32 = arith.constant 0 : i32
    %c0_i32_0 = arith.constant 0 : i32
    %c0_i32_1 = arith.constant 0 : i32
    return %c0_i32, %c0_i32_0 : i32, i32
  }
  func.func @transform_2(%arg0: i32) -> (i32, i32) {
    %c0_i32 = arith.constant 0 : i32
    %c0_i32_0 = arith.constant 0 : i32
    %c0_i32_1 = arith.constant 0 : i32
    return %c0_i32, %c0_i32_0 : i32, i32
  }
  func.func @transform_3(%arg0: i32) -> (i32, i32) {
    %c0_i32 = arith.constant 0 : i32
    %c0_i32_0 = arith.constant 0 : i32
    %c0_i32_1 = arith.constant 0 : i32
    return %c0_i32, %c0_i32_0 : i32, i32
  }
  func.func @transform_4(%arg0: i32) -> (i32, i32) {
    %c0_i32 = arith.constant 0 : i32
    %c0_i32_0 = arith.constant 0 : i32
    %c0_i32_1 = arith.constant 0 : i32
    return %c0_i32, %c0_i32_0 : i32, i32
  }
  func.func @transform_5(%arg0: i32) -> (i32, i32) {
    %c0_i32 = arith.constant 0 : i32
    %c0_i32_0 = arith.constant 0 : i32
    return %arg0, %c0_i32 : i32, i32
  }
}

module attributes {stable_mosaic.version = 11 : i64} {
  func.func @ffn_kernel_full(%arg0: i32, %arg1: memref<16x128xf32, #tpu.memory_space<vmem>>, %arg2: memref<128x256xf32, #tpu.memory_space<vmem>>, %arg3: memref<1x256xf32, #tpu.memory_space<vmem>>, %arg4: memref<256x128xf32, #tpu.memory_space<vmem>>, %arg5: memref<1x128xf32, #tpu.memory_space<vmem>>, %arg6: memref<16x128xf32, #tpu.memory_space<vmem>>) attributes {dimension_semantics = [#tpu.dimension_semantics<parallel>], iteration_bounds = array<i64: 1>, scalar_prefetch = 0 : i64, scratch_operands = 0 : i64, tpu.core_type = #tpu.core_type<tc>, window_params = [{transform_indices = @transform_0, window_bounds = array<i64: 16, 128>}, {pipeline_mode = #tpu.pipeline_mode<synchronous>, transform_indices = @transform_1, window_bounds = array<i64: 128, 256>}, {pipeline_mode = #tpu.pipeline_mode<synchronous>, transform_indices = @transform_2, window_bounds = array<i64: 1, 256>}, {pipeline_mode = #tpu.pipeline_mode<synchronous>, transform_indices = @transform_3, window_bounds = array<i64: 256, 128>}, {pipeline_mode = #tpu.pipeline_mode<synchronous>, transform_indices = @transform_4, window_bounds = array<i64: 1, 128>}, {transform_indices = @transform_5, window_bounds = array<i64: 16, 128>}]} {
    %c0 = arith.constant 0 : index
    %c0_0 = arith.constant 0 : index
    %0 = vector.load %arg1[%c0, %c0_0] : memref<16x128xf32, #tpu.memory_space<vmem>>, vector<16x128xf32>
    %c0_1 = arith.constant 0 : index
    %c0_2 = arith.constant 0 : index
    %1 = vector.load %arg2[%c0_1, %c0_2] : memref<128x256xf32, #tpu.memory_space<vmem>>, vector<128x256xf32>
    %cst = arith.constant dense<0.000000e+00> : vector<16x256xf32>
    %2 = tpu.matmul %0, %1, %cst {dimension_numbers = #tpu.dot_dimension_numbers<[1], [0], [0], [1], [0, 0, 1, 1], [], []>} : vector<16x128xf32>, vector<128x256xf32>, vector<16x256xf32> -> vector<16x256xf32>
    %c0_3 = arith.constant 0 : index
    %c0_4 = arith.constant 0 : index
    %3 = vector.load %arg3[%c0_3, %c0_4] : memref<1x256xf32, #tpu.memory_space<vmem>>, vector<1x256xf32>
    %4 = vector.broadcast %3 : vector<1x256xf32> to vector<16x256xf32>
    %5 = arith.addf %2, %4 : vector<16x256xf32>
    %cst_5 = arith.constant 0.000000e+00 : f32
    %6 = vector.broadcast %cst_5 : f32 to vector<16x256xf32>
    %7 = arith.maximumf %5, %6 : vector<16x256xf32>
    %c0_6 = arith.constant 0 : index
    %c0_7 = arith.constant 0 : index
    %8 = vector.load %arg4[%c0_6, %c0_7] : memref<256x128xf32, #tpu.memory_space<vmem>>, vector<256x128xf32>
    %cst_8 = arith.constant dense<0.000000e+00> : vector<16x128xf32>
    %9 = tpu.matmul %7, %8, %cst_8 {dimension_numbers = #tpu.dot_dimension_numbers<[1], [0], [0], [1], [0, 0, 1, 1], [], []>} : vector<16x256xf32>, vector<256x128xf32>, vector<16x128xf32> -> vector<16x128xf32>
    %c0_9 = arith.constant 0 : index
    %c0_10 = arith.constant 0 : index
    %10 = vector.load %arg5[%c0_9, %c0_10] : memref<1x128xf32, #tpu.memory_space<vmem>>, vector<1x128xf32>
    %11 = vector.broadcast %10 : vector<1x128xf32> to vector<16x128xf32>
    %12 = arith.addf %9, %11 : vector<16x128xf32>
    %c0_11 = arith.constant 0 : index
    %c0_12 = arith.constant 0 : index
    %13 = vector.load %arg6[%c0_11, %c0_12] : memref<16x128xf32, #tpu.memory_space<vmem>>, vector<16x128xf32>
    tpu.vector_store %arg6[%c0_11, %c0_12], %12 {strides = array<i32>} : memref<16x128xf32, #tpu.memory_space<vmem>>, vector<16x128xf32>,
    return
  }
  func.func @transform_0(%arg0: i32) -> (i32, i32) {
    %c0_i32 = arith.constant 0 : i32
    %c0_i32_0 = arith.constant 0 : i32
    return %arg0, %c0_i32 : i32, i32
  }
  func.func @transform_1(%arg0: i32) -> (i32, i32) {
    %c0_i32 = arith.constant 0 : i32
    %c0_i32_0 = arith.constant 0 : i32
    %c0_i32_1 = arith.constant 0 : i32
    return %c0_i32, %c0_i32_0 : i32, i32
  }
  func.func @transform_2(%arg0: i32) -> (i32, i32) {
    %c0_i32 = arith.constant 0 : i32
    %c0_i32_0 = arith.constant 0 : i32
    %c0_i32_1 = arith.constant 0 : i32
    return %c0_i32, %c0_i32_0 : i32, i32
  }
  func.func @transform_3(%arg0: i32) -> (i32, i32) {
    %c0_i32 = arith.constant 0 : i32
    %c0_i32_0 = arith.constant 0 : i32
    %c0_i32_1 = arith.constant 0 : i32
    return %c0_i32, %c0_i32_0 : i32, i32
  }
  func.func @transform_4(%arg0: i32) -> (i32, i32) {
    %c0_i32 = arith.constant 0 : i32
    %c0_i32_0 = arith.constant 0 : i32
    %c0_i32_1 = arith.constant 0 : i32
    return %c0_i32, %c0_i32_0 : i32, i32
  }
  func.func @transform_5(%arg0: i32) -> (i32, i32) {
    %c0_i32 = arith.constant 0 : i32
    %c0_i32_0 = arith.constant 0 : i32
    return %arg0, %c0_i32 : i32, i32
  }
}

</mosaic_0001>

<llo_original>
// kernel: tpu_custom_call.1
$region0: #{tpu_custom_call.1}
  #allocation0 [shape = 'u32[]', space=smem, size = 0x4, offset = 0x4, fixed_abs, tag = 'smem constant byte address 0x4 - core index']
  #allocation1 [shape = 'u32[144,128]{1,0:T(1,128)}', space=vmem, size = 0x12000, scoped, tag = 'internal scratch']
  %s0 = inlined_call_operand.hbm [shape: f32[16,128], index: 0, kind: input, shape index: {}]
  %s1 = inlined_call_operand.hbm [shape: f32[128,256], index: 1, kind: input, shape index: {}]
  %s2 = inlined_call_operand.vmem [shape: f32[1,256], index: 2, kind: input, shape index: {}]
  %s3 = inlined_call_operand.hbm [shape: f32[256,128], index: 3, kind: input, shape index: {}]
  %s4 = inlined_call_operand.vmem [shape: f32[1,128], index: 4, kind: input, shape index: {}]
  %s5 = inlined_call_operand.hbm [shape: f32[16,128], index: 5, kind: output, shape index: {}]
  %s6 = sld [smem:[#allocation0]]
  $region42: #{tpu_custom_call.1} parent=0
    _
  %s8 = ssub.s32 1, %s6
  %s9 = scalar_select 0, %s8, %s6
  $region1: #{tpu_custom_call.1} parent=0
    #allocation2 [shape = 'u8[8192]{0}', space=vmem, size = 0x2000, scoped, tag = 'input window, operand 0, single buffered']
    #allocation3 [shape = 's32[1]{0}', space=sflag, size = 0x4, scoped, tag = 'scoped memory for tpu_custom_call.1']
    #allocation4 [shape = 's32[1]{0}', space=sflag, size = 0x4, scoped, tag = 'scoped memory for tpu_custom_call.1']
    #allocation5 [shape = 'u8[131072]{0}', space=vmem, size = 0x20000, scoped, tag = 'input window, operand 1, single buffered']
    #allocation6 [shape = 's32[1]{0}', space=sflag, size = 0x4, scoped, tag = 'scoped memory for tpu_custom_call.1']
    #allocation7 [shape = 'u8[131072]{0}', space=vmem, size = 0x20000, scoped, tag = 'input window, operand 3, single buffered']
    #allocation8 [shape = 'u8[8192]{0}', space=vmem, size = 0x2000, scoped, tag = 'output window, operand 0, single buffered']
    %10 = vsyncpa [#allocation3], 0
    %11 = vsyncpa [#allocation6], 0
    %12 = vsyncpa [#allocation4], 0
    // Predicated region
    $region2: #{tpu_custom_call.1} parent=1 // pred_check
      _
    $region3: #{tpu_custom_call.1} parent=1 // pred_check_branch
      %14 = sbr.rel (0) target = $region5
    $region4: #{tpu_custom_call.1} parent=1 // pred_region
      %s16 = ssub.s32 256, 256
      %17 = vsyncadd [#allocation3], %s16
      %s18 = sshll.u32 [#allocation2], 4
      %s19 = int_to_ptr.vmem [resolvable:$true] %s18
      %24 = dma.hbm_to_vmem [thread:$0]  %s0, 256, %s19, [#allocation3], 128, 128, 8
    $region5: #{tpu_custom_call.1} parent=1 // pred_fallthru
      _
    // Predicated region
    $region6: #{tpu_custom_call.1} parent=1 // pred_check
      _
    $region7: #{tpu_custom_call.1} parent=1 // pred_check_branch
      %26 = sbr.rel (0) target = $region9
    $region8: #{tpu_custom_call.1} parent=1 // pred_region
      %s28 = ssub.s32 4096, 4096
      %29 = vsyncadd [#allocation6], %s28
      %s30 = sshll.u32 [#allocation5], 4
      %s31 = int_to_ptr.vmem [resolvable:$true] %s30
      %36 = dma.hbm_to_vmem [thread:$0]  %s1, 4096, %s31, [#allocation6], 256, 256, 16
    $region9: #{tpu_custom_call.1} parent=1 // pred_fallthru
      _
    // Predicated region
    $region10: #{tpu_custom_call.1} parent=1 // pred_check
      _
    $region11: #{tpu_custom_call.1} parent=1 // pred_check_branch
      %38 = sbr.rel (0) target = $region13
    $region12: #{tpu_custom_call.1} parent=1 // pred_region
      _
    $region13: #{tpu_custom_call.1} parent=1 // pred_fallthru
      _
    // Predicated region
    $region14: #{tpu_custom_call.1} parent=1 // pred_check
      _
    $region15: #{tpu_custom_call.1} parent=1 // pred_check_branch
      %40 = sbr.rel (0) target = $region17
    $region16: #{tpu_custom_call.1} parent=1 // pred_region
      %s42 = ssub.s32 4096, 4096
      %43 = vsyncadd [#allocation6], %s42
      %s44 = sshll.u32 [#allocation7], 4
      %s45 = int_to_ptr.vmem [resolvable:$true] %s44
      %50 = dma.hbm_to_vmem [thread:$0]  %s3, 4096, %s45, [#allocation6], 128, 128, 8
    $region17: #{tpu_custom_call.1} parent=1 // pred_fallthru
      _
    // Predicated region
    $region18: #{tpu_custom_call.1} parent=1 // pred_check
      _
    $region19: #{tpu_custom_call.1} parent=1 // pred_check_branch
      %52 = sbr.rel (0) target = $region21
    $region20: #{tpu_custom_call.1} parent=1 // pred_region
      _
    $region21: #{tpu_custom_call.1} parent=1 // pred_fallthru
      _
    // Predicated region
    $region22: #{tpu_custom_call.1} parent=1 // pred_check
      _
    $region23: #{tpu_custom_call.1} parent=1 // pred_check_branch
      %54 = sbr.rel (0) target = $region25
    $region24: #{tpu_custom_call.1} parent=1 // pred_region
      %55 = dma.done [#allocation3], 256
    $region25: #{tpu_custom_call.1} parent=1 // pred_fallthru
      _
    // Predicated region
    $region26: #{tpu_custom_call.1} parent=1 // pred_check
      _
    $region27: #{tpu_custom_call.1} parent=1 // pred_check_branch
      %57 = sbr.rel (0) target = $region29
    $region28: #{tpu_custom_call.1} parent=1 // pred_region
      %58 = dma.done [#allocation6], 4096
    $region29: #{tpu_custom_call.1} parent=1 // pred_fallthru
      _
    // Predicated region
    $region30: #{tpu_custom_call.1} parent=1 // pred_check
      _
    $region31: #{tpu_custom_call.1} parent=1 // pred_check_branch
      %60 = sbr.rel (0) target = $region33
    $region32: #{tpu_custom_call.1} parent=1 // pred_region
      %61 = dma.done [#allocation6], 4096
    $region33: #{tpu_custom_call.1} parent=1 // pred_fallthru
      _
    %v62 = vld [vmem:[#allocation2] sm:$0xff]
    %v63 = vld [vmem:[#allocation2 + $0x8] sm:$0xff]
    %v64 = vld [vmem:[#allocation5] sm:$0xff]
    %v65 = vld [vmem:[#allocation5 + $0x8] sm:$0xff]
    %v66 = vld [vmem:[#allocation5 + $0x10] sm:$0xff]
    %v67 = vld [vmem:[#allocation5 + $0x18] sm:$0xff]
    %v68 = vld [vmem:[#allocation5 + $0x20] sm:$0xff]
    %v69 = vld [vmem:[#allocation5 + $0x28] sm:$0xff]
    %v70 = vld [vmem:[#allocation5 + $0x30] sm:$0xff]
    %v71 = vld [vmem:[#allocation5 + $0x38] sm:$0xff]
    %v72 = vld [vmem:[#allocation5 + $0x40] sm:$0xff]
    %v73 = vld [vmem:[#allocation5 + $0x48] sm:$0xff]
    %v74 = vld [vmem:[#allocation5 + $0x50] sm:$0xff]
    %v75 = vld [vmem:[#allocation5 + $0x58] sm:$0xff]
    %v76 = vld [vmem:[#allocation5 + $0x60] sm:$0xff]
    %v77 = vld [vmem:[#allocation5 + $0x68] sm:$0xff]
    %v78 = vld [vmem:[#allocation5 + $0x70] sm:$0xff]
    %v79 = vld [vmem:[#allocation5 + $0x78] sm:$0xff]
    %v80 = vld [vmem:[#allocation5 + $0x80] sm:$0xff]
    %v81 = vld [vmem:[#allocation5 + $0x88] sm:$0xff]
    %v82 = vld [vmem:[#allocation5 + $0x90] sm:$0xff]
    %v83 = vld [vmem:[#allocation5 + $0x98] sm:$0xff]
    %v84 = vld [vmem:[#allocation5 + $0xa0] sm:$0xff]
    %v85 = vld [vmem:[#allocation5 + $0xa8] sm:$0xff]
    %v86 = vld [vmem:[#allocation5 + $0xb0] sm:$0xff]
    %v87 = vld [vmem:[#allocation5 + $0xb8] sm:$0xff]
    %v88 = vld [vmem:[#allocation5 + $0xc0] sm:$0xff]
    %v89 = vld [vmem:[#allocation5 + $0xc8] sm:$0xff]
    %v90 = vld [vmem:[#allocation5 + $0xd0] sm:$0xff]
    %v91 = vld [vmem:[#allocation5 + $0xd8] sm:$0xff]
    %v92 = vld [vmem:[#allocation5 + $0xe0] sm:$0xff]
    %v93 = vld [vmem:[#allocation5 + $0xe8] sm:$0xff]
    %v94 = vld [vmem:[#allocation5 + $0xf0] sm:$0xff]
    %v95 = vld [vmem:[#allocation5 + $0xf8] sm:$0xff]
    %v96 = vld [vmem:[%s2] sm:$0x3]
    %v98 = vlaneseq
    %v99 = vshrl.u32 %v98, 7
    %v100 = vsub.s32 0, %v99
    %v101 = vrot.slane %v96, %v100
    %v102 = vlaneseq
    %v103 = vshrl.u32 %v102, 7
    %v104 = vsub.s32 1, %v103
    %v105 = vrot.slane %v96, %v104
    %108 = vmatprep.subr.mxu0 %v95
    %109 = vmatpush1.msra.mxu0 %v94
    %110 = vmatprep.subr.mxu0 %v93
    %111 = vmatpush1.msra.mxu0 %v92
    %112 = vmatprep.subr.mxu0 %v91
    %113 = vmatpush1.msra.mxu0 %v90
    %114 = vmatprep.subr.mxu0 %v89
    %115 = vmatpush1.msra.mxu0 %v88
    %116 = vmatprep.subr.mxu0 %v87
    %117 = vmatpush1.msra.mxu0 %v86
    %118 = vmatprep.subr.mxu0 %v85
    %119 = vmatpush1.msra.mxu0 %v84
    %120 = vmatprep.subr.mxu0 %v83
    %121 = vmatpush1.msra.mxu0 %v82
    %122 = vmatprep.subr.mxu0 %v81
    %123 = vmatpush1.msra.mxu0 %v80
    %124 = vmatprep.subr.mxu0 %v79
    %125 = vmatpush1.msra.mxu0 %v78
    %126 = vmatprep.subr.mxu0 %v77
    %127 = vmatpush1.msra.mxu0 %v76
    %128 = vmatprep.subr.mxu0 %v75
    %129 = vmatpush1.msra.mxu0 %v74
    %130 = vmatprep.subr.mxu0 %v73
    %131 = vmatpush1.msra.mxu0 %v72
    %132 = vmatprep.subr.mxu0 %v71
    %133 = vmatpush1.msra.mxu0 %v70
    %134 = vmatprep.subr.mxu0 %v69
    %135 = vmatpush1.msra.mxu0 %v68
    %136 = vmatprep.subr.mxu0 %v67
    %137 = vmatpush1.msra.mxu0 %v66
    %138 = vmatprep.subr.mxu0 %v65
    %139 = vmatpush1.msra.mxu0 %v64
    %140 = vmatprep.subr.mxu0 0.0
    %141 = vmatpush2.msra.mxu0 0.0
    %142 = vmatprep.subr.mxu0 0.0
    %143 = vmatpush2.msra.mxu0 0.0
    %144 = vmatprep.subr.mxu0 0.0
    %145 = vmatpush2.msra.mxu0 0.0
    %146 = vmatprep.subr.mxu0 0.0
    %147 = vmatpush2.msra.mxu0 0.0
    %148 = vmatprep.subr.mxu0 0.0
    %149 = vmatpush2.msra.mxu0 0.0
    %150 = vmatprep.subr.mxu0 0.0
    %151 = vmatpush2.msra.mxu0 0.0
    %152 = vmatprep.subr.mxu0 0.0
    %153 = vmatpush2.msra.mxu0 0.0
    %154 = vmatprep.subr.mxu0 0.0
    %155 = vmatpush2.msra.mxu0 0.0
    %156 = vmatprep.subr.mxu0 0.0
    %157 = vmatpush2.msra.mxu0 0.0
    %158 = vmatprep.subr.mxu0 0.0
    %159 = vmatpush2.msra.mxu0 0.0
    %160 = vmatprep.subr.mxu0 0.0
    %161 = vmatpush2.msra.mxu0 0.0
    %162 = vmatprep.subr.mxu0 0.0
    %163 = vmatpush2.msra.mxu0 0.0
    %164 = vmatprep.subr.mxu0 0.0
    %165 = vmatpush2.msra.mxu0 0.0
    %166 = vmatprep.subr.mxu0 0.0
    %167 = vmatpush2.msra.mxu0 0.0
    %168 = vmatprep.subr.mxu0 0.0
    %169 = vmatpush2.msra.mxu0 0.0
    %170 = vmatprep.subr.mxu0 0.0
    %171 = vmatpush2.msra.mxu0 0.0
    %172 = vmatprep.mubr.f32.mxu0 0.0
    %173 = vmatmul.mubr.f32.gmra.mxu0 %v62
    %v174 = vpop.f32.mrf.mxu0
    %v175 = vadd.f32 %v101, %v174
    %v176 = vpop.f32.mrf.mxu0
    %v177 = vadd.f32 %v105, %v176
    %178 = vmatprep.mubr.f32.mxu0 0.0
    %179 = vmatmul.mubr.f32.gmra.mxu0 %v63
    %v180 = vpop.f32.mrf.mxu0
    %v181 = vadd.f32 %v101, %v180
    %v182 = vpop.f32.mrf.mxu0
    %v183 = vadd.f32 %v105, %v182
    %184 = vdwg.mxu0
    %v185 = vmax.f32 %v175, 0.0
    %v186 = vmax.f32 %v177, 0.0
    %v187 = vmax.f32 %v181, 0.0
    %v188 = vmax.f32 %v183, 0.0
    %v189 = vld [vmem:[#allocation7] sm:$0xff]
    %v190 = vld [vmem:[#allocation7 + $0x8] sm:$0xff]
    %v191 = vld [vmem:[#allocation7 + $0x10] sm:$0xff]
    %v192 = vld [vmem:[#allocation7 + $0x18] sm:$0xff]
    %v193 = vld [vmem:[#allocation7 + $0x20] sm:$0xff]
    %v194 = vld [vmem:[#allocation7 + $0x28] sm:$0xff]
    %v195 = vld [vmem:[#allocation7 + $0x30] sm:$0xff]
    %v196 = vld [vmem:[#allocation7 + $0x38] sm:$0xff]
    %v197 = vld [vmem:[#allocation7 + $0x40] sm:$0xff]
    %v198 = vld [vmem:[#allocation7 + $0x48] sm:$0xff]
    %v199 = vld [vmem:[#allocation7 + $0x50] sm:$0xff]
    %v200 = vld [vmem:[#allocation7 + $0x58] sm:$0xff]
    %v201 = vld [vmem:[#allocation7 + $0x60] sm:$0xff]
    %v202 = vld [vmem:[#allocation7 + $0x68] sm:$0xff]
    %v203 = vld [vmem:[#allocation7 + $0x70] sm:$0xff]
    %v204 = vld [vmem:[#allocation7 + $0x78] sm:$0xff]
    %v205 = vld [vmem:[#allocation7 + $0x80] sm:$0xff]
    %v206 = vld [vmem:[#allocation7 + $0x88] sm:$0xff]
    %v207 = vld [vmem:[#allocation7 + $0x90] sm:$0xff]
    %v208 = vld [vmem:[#allocation7 + $0x98] sm:$0xff]
    %v209 = vld [vmem:[#allocation7 + $0xa0] sm:$0xff]
    %v210 = vld [vmem:[#allocation7 + $0xa8] sm:$0xff]
    %v211 = vld [vmem:[#allocation7 + $0xb0] sm:$0xff]
    %v212 = vld [vmem:[#allocation7 + $0xb8] sm:$0xff]
    %v213 = vld [vmem:[#allocation7 + $0xc0] sm:$0xff]
    %v214 = vld [vmem:[#allocation7 + $0xc8] sm:$0xff]
    %v215 = vld [vmem:[#allocation7 + $0xd0] sm:$0xff]
    %v216 = vld [vmem:[#allocation7 + $0xd8] sm:$0xff]
    %v217 = vld [vmem:[#allocation7 + $0xe0] sm:$0xff]
    %v218 = vld [vmem:[#allocation7 + $0xe8] sm:$0xff]
    %v219 = vld [vmem:[#allocation7 + $0xf0] sm:$0xff]
    %v220 = vld [vmem:[#allocation7 + $0xf8] sm:$0xff]
    %v221 = vld [vmem:[%s4] sm:$0x1]
    %v223 = vlaneseq
    %v224 = vshrl.u32 %v223, 7
    %v225 = vsub.s32 0, %v224
    %v226 = vrot.slane %v221, %v225
    %228 = vmatprep.subr.mxu0 0.0
    %229 = vmatpush1.msra.mxu0 %v204
    %230 = vmatprep.subr.mxu0 0.0
    %231 = vmatpush1.msra.mxu0 %v203
    %232 = vmatprep.subr.mxu0 0.0
    %233 = vmatpush1.msra.mxu0 %v202
    %234 = vmatprep.subr.mxu0 0.0
    %235 = vmatpush1.msra.mxu0 %v201
    %236 = vmatprep.subr.mxu0 0.0
    %237 = vmatpush1.msra.mxu0 %v200
    %238 = vmatprep.subr.mxu0 0.0
    %239 = vmatpush1.msra.mxu0 %v199
    %240 = vmatprep.subr.mxu0 0.0
    %241 = vmatpush1.msra.mxu0 %v198
    %242 = vmatprep.subr.mxu0 0.0
    %243 = vmatpush1.msra.mxu0 %v197
    %244 = vmatprep.subr.mxu0 0.0
    %245 = vmatpush1.msra.mxu0 %v196
    %246 = vmatprep.subr.mxu0 0.0
    %247 = vmatpush1.msra.mxu0 %v195
    %248 = vmatprep.subr.mxu0 0.0
    %249 = vmatpush1.msra.mxu0 %v194
    %250 = vmatprep.subr.mxu0 0.0
    %251 = vmatpush1.msra.mxu0 %v193
    %252 = vmatprep.subr.mxu0 0.0
    %253 = vmatpush1.msra.mxu0 %v192
    %254 = vmatprep.subr.mxu0 0.0
    %255 = vmatpush1.msra.mxu0 %v191
    %256 = vmatprep.subr.mxu0 0.0
    %257 = vmatpush1.msra.mxu0 %v190
    %258 = vmatprep.subr.mxu0 0.0
    %259 = vmatpush1.msra.mxu0 %v189
    %260 = vmatprep.subr.mxu0 0.0
    %261 = vmatpush2.msra.mxu0 %v220
    %262 = vmatprep.subr.mxu0 0.0
    %263 = vmatpush2.msra.mxu0 %v219
    %264 = vmatprep.subr.mxu0 0.0
    %265 = vmatpush2.msra.mxu0 %v218
    %266 = vmatprep.subr.mxu0 0.0
    %267 = vmatpush2.msra.mxu0 %v217
    %268 = vmatprep.subr.mxu0 0.0
    %269 = vmatpush2.msra.mxu0 %v216
    %270 = vmatprep.subr.mxu0 0.0
    %271 = vmatpush2.msra.mxu0 %v215
    %272 = vmatprep.subr.mxu0 0.0
    %273 = vmatpush2.msra.mxu0 %v214
    %274 = vmatprep.subr.mxu0 0.0
    %275 = vmatpush2.msra.mxu0 %v213
    %276 = vmatprep.subr.mxu0 0.0
    %277 = vmatpush2.msra.mxu0 %v212
    %278 = vmatprep.subr.mxu0 0.0
    %279 = vmatpush2.msra.mxu0 %v211
    %280 = vmatprep.subr.mxu0 0.0
    %281 = vmatpush2.msra.mxu0 %v210
    %282 = vmatprep.subr.mxu0 0.0
    %283 = vmatpush2.msra.mxu0 %v209
    %284 = vmatprep.subr.mxu0 0.0
    %285 = vmatpush2.msra.mxu0 %v208
    %286 = vmatprep.subr.mxu0 0.0
    %287 = vmatpush2.msra.mxu0 %v207
    %288 = vmatprep.subr.mxu0 0.0
    %289 = vmatpush2.msra.mxu0 %v206
    %290 = vmatprep.subr.mxu0 0.0
    %291 = vmatpush2.msra.mxu0 %v205
    %292 = vmatprep.mubr.f32.mxu0 %v186
    %293 = vmatmul.mubr.f32.gmra.mxu0 %v185
    %v294 = vpop.f32.mrf.mxu0
    %v295 = vadd.f32 %v226, %v294
    %v296 = vpop.f32.mrf.mxu0
    %297 = vmatprep.mubr.f32.mxu0 %v188
    %298 = vmatmul.mubr.f32.gmra.mxu0 %v187
    %v299 = vpop.f32.mrf.mxu0
    %v300 = vadd.f32 %v226, %v299
    %v301 = vpop.f32.mrf.mxu0
    %302 = vdwg.mxu0
    %303 = vst [vmem:[#allocation8] sm:$0xff] %v295
    %304 = vst [vmem:[#allocation8 + $0x8] sm:$0xff] %v300
    // Predicated region
    $region34: #{tpu_custom_call.1} parent=1 // pred_check
      _
    $region35: #{tpu_custom_call.1} parent=1 // pred_check_branch
      %306 = sbr.rel (0) target = $region37
    $region36: #{tpu_custom_call.1} parent=1 // pred_region
      %s308 = ssub.s32 256, 256
      %309 = vsyncadd [#allocation4], %s308
      %s310 = sshll.u32 [#allocation8], 4
      %s311 = int_to_ptr.vmem [resolvable:$true] %s310
      %316 = dma.vmem_to_hbm [thread:$0]  %s311, 256, %s5, [#allocation4], 128, 128, 8
    $region37: #{tpu_custom_call.1} parent=1 // pred_fallthru
      _
    // Predicated region
    $region38: #{tpu_custom_call.1} parent=1 // pred_check
      _
    $region39: #{tpu_custom_call.1} parent=1 // pred_check_branch
      %318 = sbr.rel (0) target = $region41
    $region40: #{tpu_custom_call.1} parent=1 // pred_region
      %319 = dma.done [#allocation4], 256
    $region41: #{tpu_custom_call.1} parent=1 // pred_fallthru
      _
    %320 = vsyncpa [#allocation3], 1
    %321 = vsyncpa [#allocation6], 1
    %322 = vsyncpa [#allocation4], 1

// kernel: tpu_custom_call.1
$region0: #{tpu_custom_call.1}
  #allocation0 [shape = 'u32[]', space=smem, size = 0x4, offset = 0x4, fixed_abs, tag = 'smem constant byte address 0x4 - core index']
  #allocation1 [shape = 'u32[144,128]{1,0:T(1,128)}', space=vmem, size = 0x12000, scoped, tag = 'internal scratch']
  %s0 = inlined_call_operand.hbm [shape: f32[16,128], index: 0, kind: input, shape index: {}]
  %s1 = inlined_call_operand.hbm [shape: f32[128,256], index: 1, kind: input, shape index: {}]
  %s2 = inlined_call_operand.vmem [shape: f32[1,256], index: 2, kind: input, shape index: {}]
  %s3 = inlined_call_operand.hbm [shape: f32[256,128], index: 3, kind: input, shape index: {}]
  %s4 = inlined_call_operand.vmem [shape: f32[1,128], index: 4, kind: input, shape index: {}]
  %s5 = inlined_call_operand.hbm [shape: f32[16,128], index: 5, kind: output, shape index: {}]
  %s6 = sld [smem:[#allocation0]]
  $region42: #{tpu_custom_call.1} parent=0
    _
  %s8 = ssub.s32 1, %s6
  %s9 = scalar_select 0, %s8, %s6
  $region1: #{tpu_custom_call.1} parent=0
    #allocation2 [shape = 'u8[8192]{0}', space=vmem, size = 0x2000, scoped, tag = 'input window, operand 0, single buffered']
    #allocation3 [shape = 's32[1]{0}', space=sflag, size = 0x4, scoped, tag = 'scoped memory for tpu_custom_call.1']
    #allocation4 [shape = 's32[1]{0}', space=sflag, size = 0x4, scoped, tag = 'scoped memory for tpu_custom_call.1']
    #allocation5 [shape = 'u8[131072]{0}', space=vmem, size = 0x20000, scoped, tag = 'input window, operand 1, single buffered']
    #allocation6 [shape = 's32[1]{0}', space=sflag, size = 0x4, scoped, tag = 'scoped memory for tpu_custom_call.1']
    #allocation7 [shape = 'u8[131072]{0}', space=vmem, size = 0x20000, scoped, tag = 'input window, operand 3, single buffered']
    #allocation8 [shape = 'u8[8192]{0}', space=vmem, size = 0x2000, scoped, tag = 'output window, operand 0, single buffered']
    %10 = vsyncpa [#allocation3], 0
    %11 = vsyncpa [#allocation6], 0
    %12 = vsyncpa [#allocation4], 0
    // Predicated region
    $region2: #{tpu_custom_call.1} parent=1 // pred_check
      _
    $region3: #{tpu_custom_call.1} parent=1 // pred_check_branch
      %14 = sbr.rel (0) target = $region5
    $region4: #{tpu_custom_call.1} parent=1 // pred_region
      %s16 = ssub.s32 256, 256
      %17 = vsyncadd [#allocation3], %s16
      %s18 = sshll.u32 [#allocation2], 4
      %s19 = int_to_ptr.vmem [resolvable:$true] %s18
      %24 = dma.hbm_to_vmem [thread:$0]  %s0, 256, %s19, [#allocation3], 128, 128, 8
    $region5: #{tpu_custom_call.1} parent=1 // pred_fallthru
      _
    // Predicated region
    $region6: #{tpu_custom_call.1} parent=1 // pred_check
      _
    $region7: #{tpu_custom_call.1} parent=1 // pred_check_branch
      %26 = sbr.rel (0) target = $region9
    $region8: #{tpu_custom_call.1} parent=1 // pred_region
      %s28 = ssub.s32 4096, 4096
      %29 = vsyncadd [#allocation6], %s28
      %s30 = sshll.u32 [#allocation5], 4
      %s31 = int_to_ptr.vmem [resolvable:$true] %s30
      %36 = dma.hbm_to_vmem [thread:$0]  %s1, 4096, %s31, [#allocation6], 256, 256, 16
    $region9: #{tpu_custom_call.1} parent=1 // pred_fallthru
      _
    // Predicated region
    $region10: #{tpu_custom_call.1} parent=1 // pred_check
      _
    $region11: #{tpu_custom_call.1} parent=1 // pred_check_branch
      %38 = sbr.rel (0) target = $region13
    $region12: #{tpu_custom_call.1} parent=1 // pred_region
      _
    $region13: #{tpu_custom_call.1} parent=1 // pred_fallthru
      _
    // Predicated region
    $region14: #{tpu_custom_call.1} parent=1 // pred_check
      _
    $region15: #{tpu_custom_call.1} parent=1 // pred_check_branch
      %40 = sbr.rel (0) target = $region17
    $region16: #{tpu_custom_call.1} parent=1 // pred_region
      %s42 = ssub.s32 4096, 4096
      %43 = vsyncadd [#allocation6], %s42
      %s44 = sshll.u32 [#allocation7], 4
      %s45 = int_to_ptr.vmem [resolvable:$true] %s44
      %50 = dma.hbm_to_vmem [thread:$0]  %s3, 4096, %s45, [#allocation6], 128, 128, 8
    $region17: #{tpu_custom_call.1} parent=1 // pred_fallthru
      _
    // Predicated region
    $region18: #{tpu_custom_call.1} parent=1 // pred_check
      _
    $region19: #{tpu_custom_call.1} parent=1 // pred_check_branch
      %52 = sbr.rel (0) target = $region21
    $region20: #{tpu_custom_call.1} parent=1 // pred_region
      _
    $region21: #{tpu_custom_call.1} parent=1 // pred_fallthru
      _
    // Predicated region
    $region22: #{tpu_custom_call.1} parent=1 // pred_check
      _
    $region23: #{tpu_custom_call.1} parent=1 // pred_check_branch
      %54 = sbr.rel (0) target = $region25
    $region24: #{tpu_custom_call.1} parent=1 // pred_region
      %55 = dma.done [#allocation3], 256
    $region25: #{tpu_custom_call.1} parent=1 // pred_fallthru
      _
    // Predicated region
    $region26: #{tpu_custom_call.1} parent=1 // pred_check
      _
    $region27: #{tpu_custom_call.1} parent=1 // pred_check_branch
      %57 = sbr.rel (0) target = $region29
    $region28: #{tpu_custom_call.1} parent=1 // pred_region
      %58 = dma.done [#allocation6], 4096
    $region29: #{tpu_custom_call.1} parent=1 // pred_fallthru
      _
    // Predicated region
    $region30: #{tpu_custom_call.1} parent=1 // pred_check
      _
    $region31: #{tpu_custom_call.1} parent=1 // pred_check_branch
      %60 = sbr.rel (0) target = $region33
    $region32: #{tpu_custom_call.1} parent=1 // pred_region
      %61 = dma.done [#allocation6], 4096
    $region33: #{tpu_custom_call.1} parent=1 // pred_fallthru
      _
    %v62 = vld [vmem:[#allocation2] sm:$0xff]
    %v63 = vld [vmem:[#allocation2 + $0x8] sm:$0xff]
    %v64 = vld [vmem:[#allocation5] sm:$0xff]
    %v65 = vld [vmem:[#allocation5 + $0x8] sm:$0xff]
    %v66 = vld [vmem:[#allocation5 + $0x10] sm:$0xff]
    %v67 = vld [vmem:[#allocation5 + $0x18] sm:$0xff]
    %v68 = vld [vmem:[#allocation5 + $0x20] sm:$0xff]
    %v69 = vld [vmem:[#allocation5 + $0x28] sm:$0xff]
    %v70 = vld [vmem:[#allocation5 + $0x30] sm:$0xff]
    %v71 = vld [vmem:[#allocation5 + $0x38] sm:$0xff]
    %v72 = vld [vmem:[#allocation5 + $0x40] sm:$0xff]
    %v73 = vld [vmem:[#allocation5 + $0x48] sm:$0xff]
    %v74 = vld [vmem:[#allocation5 + $0x50] sm:$0xff]
    %v75 = vld [vmem:[#allocation5 + $0x58] sm:$0xff]
    %v76 = vld [vmem:[#allocation5 + $0x60] sm:$0xff]
    %v77 = vld [vmem:[#allocation5 + $0x68] sm:$0xff]
    %v78 = vld [vmem:[#allocation5 + $0x70] sm:$0xff]
    %v79 = vld [vmem:[#allocation5 + $0x78] sm:$0xff]
    %v80 = vld [vmem:[#allocation5 + $0x80] sm:$0xff]
    %v81 = vld [vmem:[#allocation5 + $0x88] sm:$0xff]
    %v82 = vld [vmem:[#allocation5 + $0x90] sm:$0xff]
    %v83 = vld [vmem:[#allocation5 + $0x98] sm:$0xff]
    %v84 = vld [vmem:[#allocation5 + $0xa0] sm:$0xff]
    %v85 = vld [vmem:[#allocation5 + $0xa8] sm:$0xff]
    %v86 = vld [vmem:[#allocation5 + $0xb0] sm:$0xff]
    %v87 = vld [vmem:[#allocation5 + $0xb8] sm:$0xff]
    %v88 = vld [vmem:[#allocation5 + $0xc0] sm:$0xff]
    %v89 = vld [vmem:[#allocation5 + $0xc8] sm:$0xff]
    %v90 = vld [vmem:[#allocation5 + $0xd0] sm:$0xff]
    %v91 = vld [vmem:[#allocation5 + $0xd8] sm:$0xff]
    %v92 = vld [vmem:[#allocation5 + $0xe0] sm:$0xff]
    %v93 = vld [vmem:[#allocation5 + $0xe8] sm:$0xff]
    %v94 = vld [vmem:[#allocation5 + $0xf0] sm:$0xff]
    %v95 = vld [vmem:[#allocation5 + $0xf8] sm:$0xff]
    %v96 = vld [vmem:[%s2] sm:$0x3]
    %v98 = vlaneseq
    %v99 = vshrl.u32 %v98, 7
    %v100 = vsub.s32 0, %v99
    %v101 = vrot.slane %v96, %v100
    %v102 = vlaneseq
    %v103 = vshrl.u32 %v102, 7
    %v104 = vsub.s32 1, %v103
    %v105 = vrot.slane %v96, %v104
    %108 = vmatprep.subr.mxu0 %v95
    %109 = vmatpush1.msra.mxu0 %v94
    %110 = vmatprep.subr.mxu0 %v93
    %111 = vmatpush1.msra.mxu0 %v92
    %112 = vmatprep.subr.mxu0 %v91
    %113 = vmatpush1.msra.mxu0 %v90
    %114 = vmatprep.subr.mxu0 %v89
    %115 = vmatpush1.msra.mxu0 %v88
    %116 = vmatprep.subr.mxu0 %v87
    %117 = vmatpush1.msra.mxu0 %v86
    %118 = vmatprep.subr.mxu0 %v85
    %119 = vmatpush1.msra.mxu0 %v84
    %120 = vmatprep.subr.mxu0 %v83
    %121 = vmatpush1.msra.mxu0 %v82
    %122 = vmatprep.subr.mxu0 %v81
    %123 = vmatpush1.msra.mxu0 %v80
    %124 = vmatprep.subr.mxu0 %v79
    %125 = vmatpush1.msra.mxu0 %v78
    %126 = vmatprep.subr.mxu0 %v77
    %127 = vmatpush1.msra.mxu0 %v76
    %128 = vmatprep.subr.mxu0 %v75
    %129 = vmatpush1.msra.mxu0 %v74
    %130 = vmatprep.subr.mxu0 %v73
    %131 = vmatpush1.msra.mxu0 %v72
    %132 = vmatprep.subr.mxu0 %v71
    %133 = vmatpush1.msra.mxu0 %v70
    %134 = vmatprep.subr.mxu0 %v69
    %135 = vmatpush1.msra.mxu0 %v68
    %136 = vmatprep.subr.mxu0 %v67
    %137 = vmatpush1.msra.mxu0 %v66
    %138 = vmatprep.subr.mxu0 %v65
    %139 = vmatpush1.msra.mxu0 %v64
    %140 = vmatprep.subr.mxu0 0.0
    %141 = vmatpush2.msra.mxu0 0.0
    %142 = vmatprep.subr.mxu0 0.0
    %143 = vmatpush2.msra.mxu0 0.0
    %144 = vmatprep.subr.mxu0 0.0
    %145 = vmatpush2.msra.mxu0 0.0
    %146 = vmatprep.subr.mxu0 0.0
    %147 = vmatpush2.msra.mxu0 0.0
    %148 = vmatprep.subr.mxu0 0.0
    %149 = vmatpush2.msra.mxu0 0.0
    %150 = vmatprep.subr.mxu0 0.0
    %151 = vmatpush2.msra.mxu0 0.0
    %152 = vmatprep.subr.mxu0 0.0
    %153 = vmatpush2.msra.mxu0 0.0
    %154 = vmatprep.subr.mxu0 0.0
    %155 = vmatpush2.msra.mxu0 0.0
    %156 = vmatprep.subr.mxu0 0.0
    %157 = vmatpush2.msra.mxu0 0.0
    %158 = vmatprep.subr.mxu0 0.0
    %159 = vmatpush2.msra.mxu0 0.0
    %160 = vmatprep.subr.mxu0 0.0
    %161 = vmatpush2.msra.mxu0 0.0
    %162 = vmatprep.subr.mxu0 0.0
    %163 = vmatpush2.msra.mxu0 0.0
    %164 = vmatprep.subr.mxu0 0.0
    %165 = vmatpush2.msra.mxu0 0.0
    %166 = vmatprep.subr.mxu0 0.0
    %167 = vmatpush2.msra.mxu0 0.0
    %168 = vmatprep.subr.mxu0 0.0
    %169 = vmatpush2.msra.mxu0 0.0
    %170 = vmatprep.subr.mxu0 0.0
    %171 = vmatpush2.msra.mxu0 0.0
    %172 = vmatprep.mubr.f32.mxu0 0.0
    %173 = vmatmul.mubr.f32.gmra.mxu0 %v62
    %v174 = vpop.f32.mrf.mxu0
    %v175 = vadd.f32 %v101, %v174
    %v176 = vpop.f32.mrf.mxu0
    %v177 = vadd.f32 %v105, %v176
    %178 = vmatprep.mubr.f32.mxu0 0.0
    %179 = vmatmul.mubr.f32.gmra.mxu0 %v63
    %v180 = vpop.f32.mrf.mxu0
    %v181 = vadd.f32 %v101, %v180
    %v182 = vpop.f32.mrf.mxu0
    %v183 = vadd.f32 %v105, %v182
    %184 = vdwg.mxu0
    %v185 = vmax.f32 %v175, 0.0
    %v186 = vmax.f32 %v177, 0.0
    %v187 = vmax.f32 %v181, 0.0
    %v188 = vmax.f32 %v183, 0.0
    %v189 = vld [vmem:[#allocation7] sm:$0xff]
    %v190 = vld [vmem:[#allocation7 + $0x8] sm:$0xff]
    %v191 = vld [vmem:[#allocation7 + $0x10] sm:$0xff]
    %v192 = vld [vmem:[#allocation7 + $0x18] sm:$0xff]
    %v193 = vld [vmem:[#allocation7 + $0x20] sm:$0xff]
    %v194 = vld [vmem:[#allocation7 + $0x28] sm:$0xff]
    %v195 = vld [vmem:[#allocation7 + $0x30] sm:$0xff]
    %v196 = vld [vmem:[#allocation7 + $0x38] sm:$0xff]
    %v197 = vld [vmem:[#allocation7 + $0x40] sm:$0xff]
    %v198 = vld [vmem:[#allocation7 + $0x48] sm:$0xff]
    %v199 = vld [vmem:[#allocation7 + $0x50] sm:$0xff]
    %v200 = vld [vmem:[#allocation7 + $0x58] sm:$0xff]
    %v201 = vld [vmem:[#allocation7 + $0x60] sm:$0xff]
    %v202 = vld [vmem:[#allocation7 + $0x68] sm:$0xff]
    %v203 = vld [vmem:[#allocation7 + $0x70] sm:$0xff]
    %v204 = vld [vmem:[#allocation7 + $0x78] sm:$0xff]
    %v205 = vld [vmem:[#allocation7 + $0x80] sm:$0xff]
    %v206 = vld [vmem:[#allocation7 + $0x88] sm:$0xff]
    %v207 = vld [vmem:[#allocation7 + $0x90] sm:$0xff]
    %v208 = vld [vmem:[#allocation7 + $0x98] sm:$0xff]
    %v209 = vld [vmem:[#allocation7 + $0xa0] sm:$0xff]
    %v210 = vld [vmem:[#allocation7 + $0xa8] sm:$0xff]
    %v211 = vld [vmem:[#allocation7 + $0xb0] sm:$0xff]
    %v212 = vld [vmem:[#allocation7 + $0xb8] sm:$0xff]
    %v213 = vld [vmem:[#allocation7 + $0xc0] sm:$0xff]
    %v214 = vld [vmem:[#allocation7 + $0xc8] sm:$0xff]
    %v215 = vld [vmem:[#allocation7 + $0xd0] sm:$0xff]
    %v216 = vld [vmem:[#allocation7 + $0xd8] sm:$0xff]
    %v217 = vld [vmem:[#allocation7 + $0xe0] sm:$0xff]
    %v218 = vld [vmem:[#allocation7 + $0xe8] sm:$0xff]
    %v219 = vld [vmem:[#allocation7 + $0xf0] sm:$0xff]
    %v220 = vld [vmem:[#allocation7 + $0xf8] sm:$0xff]
    %v221 = vld [vmem:[%s4] sm:$0x1]
    %v223 = vlaneseq
    %v224 = vshrl.u32 %v223, 7
    %v225 = vsub.s32 0, %v224
    %v226 = vrot.slane %v221, %v225
    %228 = vmatprep.subr.mxu0 0.0
    %229 = vmatpush1.msra.mxu0 %v204
    %230 = vmatprep.subr.mxu0 0.0
    %231 = vmatpush1.msra.mxu0 %v203
    %232 = vmatprep.subr.mxu0 0.0
    %233 = vmatpush1.msra.mxu0 %v202
    %234 = vmatprep.subr.mxu0 0.0
    %235 = vmatpush1.msra.mxu0 %v201
    %236 = vmatprep.subr.mxu0 0.0
    %237 = vmatpush1.msra.mxu0 %v200
    %238 = vmatprep.subr.mxu0 0.0
    %239 = vmatpush1.msra.mxu0 %v199
    %240 = vmatprep.subr.mxu0 0.0
    %241 = vmatpush1.msra.mxu0 %v198
    %242 = vmatprep.subr.mxu0 0.0
    %243 = vmatpush1.msra.mxu0 %v197
    %244 = vmatprep.subr.mxu0 0.0
    %245 = vmatpush1.msra.mxu0 %v196
    %246 = vmatprep.subr.mxu0 0.0
    %247 = vmatpush1.msra.mxu0 %v195
    %248 = vmatprep.subr.mxu0 0.0
    %249 = vmatpush1.msra.mxu0 %v194
    %250 = vmatprep.subr.mxu0 0.0
    %251 = vmatpush1.msra.mxu0 %v193
    %252 = vmatprep.subr.mxu0 0.0
    %253 = vmatpush1.msra.mxu0 %v192
    %254 = vmatprep.subr.mxu0 0.0
    %255 = vmatpush1.msra.mxu0 %v191
    %256 = vmatprep.subr.mxu0 0.0
    %257 = vmatpush1.msra.mxu0 %v190
    %258 = vmatprep.subr.mxu0 0.0
    %259 = vmatpush1.msra.mxu0 %v189
    %260 = vmatprep.subr.mxu0 0.0
    %261 = vmatpush2.msra.mxu0 %v220
    %262 = vmatprep.subr.mxu0 0.0
    %263 = vmatpush2.msra.mxu0 %v219
    %264 = vmatprep.subr.mxu0 0.0
    %265 = vmatpush2.msra.mxu0 %v218
    %266 = vmatprep.subr.mxu0 0.0
    %267 = vmatpush2.msra.mxu0 %v217
    %268 = vmatprep.subr.mxu0 0.0
    %269 = vmatpush2.msra.mxu0 %v216
    %270 = vmatprep.subr.mxu0 0.0
    %271 = vmatpush2.msra.mxu0 %v215
    %272 = vmatprep.subr.mxu0 0.0
    %273 = vmatpush2.msra.mxu0 %v214
    %274 = vmatprep.subr.mxu0 0.0
    %275 = vmatpush2.msra.mxu0 %v213
    %276 = vmatprep.subr.mxu0 0.0
    %277 = vmatpush2.msra.mxu0 %v212
    %278 = vmatprep.subr.mxu0 0.0
    %279 = vmatpush2.msra.mxu0 %v211
    %280 = vmatprep.subr.mxu0 0.0
    %281 = vmatpush2.msra.mxu0 %v210
    %282 = vmatprep.subr.mxu0 0.0
    %283 = vmatpush2.msra.mxu0 %v209
    %284 = vmatprep.subr.mxu0 0.0
    %285 = vmatpush2.msra.mxu0 %v208
    %286 = vmatprep.subr.mxu0 0.0
    %287 = vmatpush2.msra.mxu0 %v207
    %288 = vmatprep.subr.mxu0 0.0
    %289 = vmatpush2.msra.mxu0 %v206
    %290 = vmatprep.subr.mxu0 0.0
    %291 = vmatpush2.msra.mxu0 %v205
    %292 = vmatprep.mubr.f32.mxu0 %v186
    %293 = vmatmul.mubr.f32.gmra.mxu0 %v185
    %v294 = vpop.f32.mrf.mxu0
    %v295 = vadd.f32 %v226, %v294
    %v296 = vpop.f32.mrf.mxu0
    %297 = vmatprep.mubr.f32.mxu0 %v188
    %298 = vmatmul.mubr.f32.gmra.mxu0 %v187
    %v299 = vpop.f32.mrf.mxu0
    %v300 = vadd.f32 %v226, %v299
    %v301 = vpop.f32.mrf.mxu0
    %302 = vdwg.mxu0
    %303 = vst [vmem:[#allocation8] sm:$0xff] %v295
    %304 = vst [vmem:[#allocation8 + $0x8] sm:$0xff] %v300
    // Predicated region
    $region34: #{tpu_custom_call.1} parent=1 // pred_check
      _
    $region35: #{tpu_custom_call.1} parent=1 // pred_check_branch
      %306 = sbr.rel (0) target = $region37
    $region36: #{tpu_custom_call.1} parent=1 // pred_region
      %s308 = ssub.s32 256, 256
      %309 = vsyncadd [#allocation4], %s308
      %s310 = sshll.u32 [#allocation8], 4
      %s311 = int_to_ptr.vmem [resolvable:$true] %s310
      %316 = dma.vmem_to_hbm [thread:$0]  %s311, 256, %s5, [#allocation4], 128, 128, 8
    $region37: #{tpu_custom_call.1} parent=1 // pred_fallthru
      _
    // Predicated region
    $region38: #{tpu_custom_call.1} parent=1 // pred_check
      _
    $region39: #{tpu_custom_call.1} parent=1 // pred_check_branch
      %318 = sbr.rel (0) target = $region41
    $region40: #{tpu_custom_call.1} parent=1 // pred_region
      %319 = dma.done [#allocation4], 256
    $region41: #{tpu_custom_call.1} parent=1 // pred_fallthru
      _
    %320 = vsyncpa [#allocation3], 1
    %321 = vsyncpa [#allocation6], 1
    %322 = vsyncpa [#allocation4], 1

</llo_original>
